<compile_context>
chip_gen: v7x
topology: tpu7x:2x2x1
jax: 0.10.0
libtpu: 0.0.40
codegen_flags: <defaults>
</compile_context>

<pallas_src>
import functools

import jax
import jax.numpy as jnp
from jax.experimental import pallas as pl
from jax.experimental.pallas import tpu as pltpu

_LANE = 128
_VMEM_LIMIT = 48 * 1024 * 1024   # <= 48 MiB: fits v5e/v6e (128 MiB) and v7x (64 MiB/TC)
_FUSE_MAX_NPAD = 2048            # padded bf16 A_hat <= 8 MiB -> keep A VMEM-resident


def _round_up(x, m):
    return (x + m - 1) // m * m


def _pick_tile(n, requested):
    """Lane-aligned tile, N-aware: aim for >= ~4 row tiles, cap at `requested`."""
    requested = max(_LANE, _round_up(requested, _LANE))
    return min(requested, max(_LANE, _round_up(-(-n // 4), _LANE)))


# ---------------------------------------------------------------------------
# Normalized adjacency, built directly into the padded bf16 slab.
# ---------------------------------------------------------------------------
def build_norm_adj_padded(edge_index, num_nodes, n_pad, dtype=jnp.bfloat16):
    """D^{-1/2}(A + I)D^{-1/2} with A[target, source], written into an
    (n_pad, n_pad) slab of `dtype`.

    Existing self-loop edges are dropped and every node gets exactly one
    self-loop of weight 1 (mirrors PyG add_remaining_self_loops); duplicate
    off-diagonal edges accumulate as in PyG's scatter semantics. Padded
    rows/columns stay exactly zero.
    """
    # TODO(synk): for large sparse graphs replace this dense N x N build with a
    # scalar-prefetch CSR gather / segment-sum Pallas kernel (O(|E|) HBM).
    src, dst = edge_index[0], edge_index[1]
    w = jnp.where(src == dst, 0.0, 1.0).astype(jnp.float32)
    a = jnp.zeros((n_pad, n_pad), jnp.float32).at[dst, src].add(w)
    diag = jnp.arange(num_nodes)
    a = a.at[diag, diag].add(1.0)                      # self loops, no NxN eye
    deg = a.sum(axis=1)                                # padded rows: degree 0
    dinv = jnp.where(deg > 0.0, jax.lax.rsqrt(deg), 0.0)
    return (dinv[:, None] * a * dinv[None, :]).astype(dtype)   # fused norm + cast


def build_norm_adj(edge_index, num_nodes):
    return build_norm_adj_padded(edge_index, num_nodes, num_nodes, dtype=jnp.float32)


# ---------------------------------------------------------------------------
# Kernel 1: feature projection  Z = F @ W   (hoisted out of the aggregation loop)
# ---------------------------------------------------------------------------
def _project_kernel(f_ref, w_ref, z_ref):
    z_ref[...] = jnp.dot(
        f_ref[...], w_ref[...], preferred_element_type=jnp.float32
    ).astype(z_ref.dtype)


def _project(feats, w, *, tile):
    n_pad, c_in = feats.shape
    hp = w.shape[1]
    return pl.pallas_call(
        _project_kernel,
        out_shape=jax.ShapeDtypeStruct((n_pad, hp), jnp.bfloat16),
        grid_spec=pltpu.PrefetchScalarGridSpec(
            num_scalar_prefetch=0,
            grid=(n_pad // tile,),
            in_specs=[
                pl.BlockSpec((tile, c_in), lambda i: (i, 0)),   # feature row tile
                pl.BlockSpec((c_in, hp), lambda i: (0, 0)),     # weight (VMEM-resident)
            ],
            out_specs=pl.BlockSpec((tile, hp), lambda i: (i, 0)),
        ),
        compiler_params=pltpu.CompilerParams(
            dimension_semantics=("parallel",),
            vmem_limit_bytes=_VMEM_LIMIT,
        ),
    )(feats, w)


# ---------------------------------------------------------------------------
# Kernel 2: aggregation  O = A_hat @ Z + b  (+ optional ReLU), tiled (rows, K)
# ---------------------------------------------------------------------------
def _aggregate_kernel(a_ref, z_ref, b_ref, o_ref, acc_ref, *, apply_relu):
    k = pl.program_id(1)

    @pl.when(k == 0)
    def _():
        acc_ref[...] = jnp.zeros_like(acc_ref)

    # bf16 operands, f32 MXU accumulation; Z is pre-projected (no in-loop recompute).
    acc_ref[...] += jnp.dot(a_ref[...], z_ref[...], preferred_element_type=jnp.float32)

    @pl.when(k == pl.num_programs(1) - 1)
    def _():
        r = acc_ref[...] + b_ref[...]
        if apply_relu:
            r = jnp.maximum(r, 0.0)
        o_ref[...] = r.astype(o_ref.dtype)


def _aggregate(a_pad, z, b, *, tile, apply_relu, out_dtype):
    n_pad = a_pad.shape[0]
    hp = z.shape[1]
    kernel = functools.partial(_aggregate_kernel, apply_relu=apply_relu)
    return pl.pallas_call(
        kernel,
        out_shape=jax.ShapeDtypeStruct((n_pad, hp), out_dtype),
        grid_spec=pltpu.PrefetchScalarGridSpec(
            num_scalar_prefetch=0,
            grid=(n_pad // tile, n_pad // tile),                  # reduction axis last
            in_specs=[
                pl.BlockSpec((tile, tile), lambda i, k: (i, k)),  # A_hat tile (streamed)
                pl.BlockSpec((tile, hp), lambda i, k: (k, 0)),    # Z K-tile (bf16)
                pl.BlockSpec((1, hp), lambda i, k: (0, 0)),       # bias (VMEM-resident)
            ],
            out_specs=pl.BlockSpec((tile, hp), lambda i, k: (i, 0)),
            scratch_shapes=[pltpu.VMEM((tile, hp), jnp.float32)],
        ),
        compiler_params=pltpu.CompilerParams(
            dimension_semantics=("parallel", "arbitrary"),
            vmem_limit_bytes=_VMEM_LIMIT,
        ),
    )(a_pad, z, b)


# ---------------------------------------------------------------------------
# Kernel 3: fused two-layer path for small/medium graphs -- A_hat is VMEM
# resident and read from HBM once for BOTH layers.
# ---------------------------------------------------------------------------
def _fused_kernel(a_ref, x_ref, w1_ref, b1_ref, w2_ref, b2_ref, o_ref):
    a = a_ref[...]
    z1 = jnp.dot(x_ref[...], w1_ref[...], preferred_element_type=jnp.float32)
    h1 = jnp.maximum(
        jnp.dot(a, z1.astype(jnp.bfloat16), preferred_element_type=jnp.float32)
        + b1_ref[...],
        0.0,
    )
    z2 = jnp.dot(h1.astype(jnp.bfloat16), w2_ref[...], preferred_element_type=jnp.float32)
    o_ref[...] = (
        jnp.dot(a, z2.astype(jnp.bfloat16), preferred_element_type=jnp.float32)
        + b2_ref[...]
    ).astype(o_ref.dtype)


def _gcn_fused(a_pad, x_pad, w1, b1, w2, b2):
    n_pad, c_in = x_pad.shape
    hp = w1.shape[1]

    def full(shape):
        return pl.BlockSpec(shape, lambda i: (0,) * len(shape))

    return pl.pallas_call(
        _fused_kernel,
        out_shape=jax.ShapeDtypeStruct((n_pad, hp), jnp.float32),
        grid_spec=pltpu.PrefetchScalarGridSpec(
            num_scalar_prefetch=0,
            grid=(1,),
            in_specs=[
                full((n_pad, n_pad)),   # A_hat (bf16), loaded once
                full((n_pad, c_in)),    # X (bf16)
                full((c_in, hp)),       # W1
                full((1, hp)),          # b1
                full((hp, hp)),         # W2
                full((1, hp)),          # b2
            ],
            out_specs=full((n_pad, hp)),
        ),
        compiler_params=pltpu.CompilerParams(
            dimension_semantics=("arbitrary",),
            vmem_limit_bytes=_VMEM_LIMIT,
        ),
    )(a_pad, x_pad, w1, b1, w2, b2)


# ---------------------------------------------------------------------------
# Wrapper
# ---------------------------------------------------------------------------
def gcn_encoder(x, edge_index, w1, b1, w2, b2, *, tile=1024, fuse=None):
    """Two-layer GCN forward. `tile` caps the A_hat tile edge (general path);
    `fuse=None` auto-selects the fused A-resident path for small graphs."""
    n, c_in = x.shape
    hidden = w1.shape[1]
    hp = _round_up(hidden, _LANE)

    if fuse is None:
        fuse = _round_up(n, _LANE) <= _FUSE_MAX_NPAD

    t = _pick_tile(n, tile)
    n_pad = _round_up(n, _LANE) if fuse else _round_up(n, t)

    # Padded parameters (hidden padded to 128 lanes -> lane-dense stores).
    w1_p = jnp.zeros((c_in, hp), jnp.bfloat16).at[:, :hidden].set(w1.astype(jnp.bfloat16))
    w2_p = jnp.zeros((hp, hp), jnp.bfloat16).at[:hidden, :hidden].set(w2.astype(jnp.bfloat16))
    b1_p = jnp.zeros((1, hp), jnp.float32).at[:, :hidden].set(b1.reshape(1, -1).astype(jnp.float32))
    b2_p = jnp.zeros((1, hp), jnp.float32).at[:, :hidden].set(b2.reshape(1, -1).astype(jnp.float32))

    # Normalized adjacency built directly into the padded bf16 slab.
    a_pad = build_norm_adj_padded(edge_index, n, n_pad)
    x_pad = jnp.zeros((n_pad, c_in), jnp.bfloat16).at[:n, :].set(x.astype(jnp.bfloat16))

    if fuse:
        y = _gcn_fused(a_pad, x_pad, w1_p, b1_p, w2_p, b2_p)
    else:
        # Layer 1: projection pass, then A_hat aggregation (+bias, ReLU).
        # Note: padded rows of h1 are relu(b1) != 0; harmless because the
        # matching A_hat columns are zero and padded output rows are sliced off.
        z1 = _project(x_pad, w1_p, tile=t)
        h1 = _aggregate(a_pad, z1, b1_p, tile=t, apply_relu=True, out_dtype=jnp.bfloat16)
        # Layer 2.
        z2 = _project(h1, w2_p, tile=t)
        y = _aggregate(a_pad, z2, b2_p, tile=t, apply_relu=False, out_dtype=jnp.float32)
    return y[:n, :hidden]


# ---------------------------------------------------------------------------
# References
# ---------------------------------------------------------------------------
def reference_f32(x, edge_index, w1, b1, w2, b2):
    a_hat = build_norm_adj(edge_index, x.shape[0])
    h1 = jnp.maximum(a_hat @ (x @ w1) + b1, 0.0)
    return a_hat @ (h1 @ w2) + b2


def reference_bf16(x, edge_index, w1, b1, w2, b2):
    """Mirrors the kernels' precision (bf16 operands, f32 MXU accumulation)."""
    a = build_norm_adj(edge_index, x.shape[0]).astype(jnp.bfloat16)
    xb, w1b, w2b = (t.astype(jnp.bfloat16) for t in (x, w1, w2))
    z1 = jnp.dot(xb, w1b, preferred_element_type=jnp.float32).astype(jnp.bfloat16)
    h1 = jnp.maximum(jnp.dot(a, z1, preferred_element_type=jnp.float32) + b1, 0.0)
    z2 = jnp.dot(h1.astype(jnp.bfloat16), w2b,
                 preferred_element_type=jnp.float32).astype(jnp.bfloat16)
    return jnp.dot(a, z2, preferred_element_type=jnp.float32) + b2


if __name__ == "__main__":
    key = jax.random.PRNGKey(0)
    k_x, k_e, k_w1, k_b1, k_w2, k_b2 = jax.random.split(key, 6)

    num_nodes = 200
    in_channels = 16
    hidden_channels = 32
    num_edges = 800

    x = jax.random.normal(k_x, (num_nodes, in_channels), jnp.float32)
    edge_index = jax.random.randint(k_e, (2, num_edges), 0, num_nodes, jnp.int32)

    w1 = jax.random.normal(k_w1, (in_channels, hidden_channels), jnp.float32) * (
        1.0 / jnp.sqrt(in_channels)
    )
    b1 = 0.1 * jax.random.normal(k_b1, (1, hidden_channels), jnp.float32)
    w2 = jax.random.normal(k_w2, (hidden_channels, hidden_channels), jnp.float32) * (
        1.0 / jnp.sqrt(hidden_channels)
    )
    b2 = 0.1 * jax.random.normal(k_b2, (1, hidden_channels), jnp.float32)

    ref_bf = reference_bf16(x, edge_index, w1, b1, w2, b2)
    ref_f32 = reference_f32(x, edge_index, w1, b1, w2, b2)

    # Path 1: fused small-graph kernel (auto-selected; A_hat read from HBM once).
    run_fused = jax.jit(gcn_encoder)
    out_fused = jax.block_until_ready(run_fused(x, edge_index, w1, b1, w2, b2))

    # Path 2: general tiled path with small tiles so a real (2, 2) grid is
    # exercised (row tiling, K accumulation, pl.when init/finalize, padding).
    run_tiled = jax.jit(functools.partial(gcn_encoder, tile=128, fuse=False))
    out_tiled = jax.block_until_ready(run_tiled(x, edge_index, w1, b1, w2, b2))

    for name, out in (("fused", out_fused), ("tiled", out_tiled)):
        assert out.shape == (num_nodes, hidden_channels), (name, out.shape)
        err_bf = float(jnp.max(jnp.abs(out - ref_bf)))
        assert jnp.allclose(out, ref_bf, atol=5e-3, rtol=5e-3), (
            f"{name}: bf16-ref max abs err {err_bf}"
        )
        err_f32 = float(jnp.max(jnp.abs(out - ref_f32)))
        assert jnp.allclose(out, ref_f32, atol=7.5e-2, rtol=7.5e-2), (
            f"{name}: f32-ref max abs err {err_f32}"
        )

    assert jnp.allclose(out_fused, out_tiled, atol=5e-3, rtol=5e-3), (
        "fused vs tiled mismatch"
    )
    print("KERNEL_OK")
</pallas_src>

<mosaic_0001>
module attributes {stable_mosaic.version = 11 : i64} {
  func.func private @main(%arg0: i32) attributes {dimension_semantics = [#tpu.dimension_semantics<core_parallel>], iteration_bounds = array<i64: 2>, tpu.core_type = #tpu.core_type<sc_scalar_subcore>, window_params = []} {
    return
  }
}

module attributes {stable_mosaic.version = 11 : i64} {
  func.func private @main(%arg0: i32) attributes {dimension_semantics = [#tpu.dimension_semantics<core_parallel>], iteration_bounds = array<i64: 2>, tpu.core_type = #tpu.core_type<sc_scalar_subcore>, window_params = []} {
    return
  }
}

module attributes {stable_mosaic.version = 11 : i64} {
  func.func @_fused_kernel(%arg0: i32, %arg1: memref<256x256xbf16, #tpu.memory_space<vmem>>, %arg2: memref<256x16xbf16, #tpu.memory_space<vmem>>, %arg3: memref<16x128xbf16, #tpu.memory_space<vmem>>, %arg4: memref<1x128xf32, #tpu.memory_space<vmem>>, %arg5: memref<128x128xbf16, #tpu.memory_space<vmem>>, %arg6: memref<1x128xf32, #tpu.memory_space<vmem>>, %arg7: memref<256x128xf32, #tpu.memory_space<vmem>>) attributes {dimension_semantics = [#tpu.dimension_semantics<arbitrary>], iteration_bounds = array<i64: 1>, scalar_prefetch = 0 : i64, scratch_operands = 0 : i64, tpu.core_type = #tpu.core_type<tc>, window_params = [{pipeline_mode = #tpu.pipeline_mode<synchronous>, transform_indices = @transform_0, window_bounds = array<i64: 256, 256>}, {pipeline_mode = #tpu.pipeline_mode<synchronous>, transform_indices = @transform_1, window_bounds = array<i64: 256, 16>}, {pipeline_mode = #tpu.pipeline_mode<synchronous>, transform_indices = @transform_2, window_bounds = array<i64: 16, 128>}, {pipeline_mode = #tpu.pipeline_mode<synchronous>, transform_indices = @transform_3, window_bounds = array<i64: 1, 128>}, {pipeline_mode = #tpu.pipeline_mode<synchronous>, transform_indices = @transform_4, window_bounds = array<i64: 128, 128>}, {pipeline_mode = #tpu.pipeline_mode<synchronous>, transform_indices = @transform_5, window_bounds = array<i64: 1, 128>}, {pipeline_mode = #tpu.pipeline_mode<synchronous>, transform_indices = @transform_6, window_bounds = array<i64: 256, 128>}]} {
    %c0 = arith.constant 0 : index
    %c0_0 = arith.constant 0 : index
    %0 = vector.load %arg1[%c0, %c0_0] : memref<256x256xbf16, #tpu.memory_space<vmem>>, vector<256x256xbf16>
    %c0_1 = arith.constant 0 : index
    %c0_2 = arith.constant 0 : index
    %1 = vector.load %arg2[%c0_1, %c0_2] : memref<256x16xbf16, #tpu.memory_space<vmem>>, vector<256x16xbf16>
    %c0_3 = arith.constant 0 : index
    %c0_4 = arith.constant 0 : index
    %2 = vector.load %arg3[%c0_3, %c0_4] : memref<16x128xbf16, #tpu.memory_space<vmem>>, vector<16x128xbf16>
    %cst = arith.constant dense<0.000000e+00> : vector<256x128xf32>
    %3 = tpu.matmul %1, %2, %cst {dimension_numbers = #tpu.dot_dimension_numbers<[1], [0], [0], [1], [0, 0, 1, 1], [], []>} : vector<256x16xbf16>, vector<16x128xbf16>, vector<256x128xf32> -> vector<256x128xf32>
    %4 = arith.truncf %3 : vector<256x128xf32> to vector<256x128xbf16>
    %cst_5 = arith.constant dense<0.000000e+00> : vector<256x128xf32>
    %5 = tpu.matmul %0, %4, %cst_5 {dimension_numbers = #tpu.dot_dimension_numbers<[1], [0], [0], [1], [0, 0, 1, 1], [], []>} : vector<256x256xbf16>, vector<256x128xbf16>, vector<256x128xf32> -> vector<256x128xf32>
    %c0_6 = arith.constant 0 : index
    %c0_7 = arith.constant 0 : index
    %6 = vector.load %arg4[%c0_6, %c0_7] : memref<1x128xf32, #tpu.memory_space<vmem>>, vector<1x128xf32>
    %7 = vector.broadcast %6 : vector<1x128xf32> to vector<256x128xf32>
    %8 = arith.addf %5, %7 : vector<256x128xf32>
    %cst_8 = arith.constant 0.000000e+00 : f32
    %9 = vector.broadcast %cst_8 : f32 to vector<256x128xf32>
    %10 = arith.maximumf %8, %9 : vector<256x128xf32>
    %11 = arith.truncf %10 : vector<256x128xf32> to vector<256x128xbf16>
    %c0_9 = arith.constant 0 : index
    %c0_10 = arith.constant 0 : index
    %12 = vector.load %arg5[%c0_9, %c0_10] : memref<128x128xbf16, #tpu.memory_space<vmem>>, vector<128x128xbf16>
    %cst_11 = arith.constant dense<0.000000e+00> : vector<256x128xf32>
    %13 = tpu.matmul %11, %12, %cst_11 {dimension_numbers = #tpu.dot_dimension_numbers<[1], [0], [0], [1], [0, 0, 1, 1], [], []>} : vector<256x128xbf16>, vector<128x128xbf16>, vector<256x128xf32> -> vector<256x128xf32>
    %14 = arith.truncf %13 : vector<256x128xf32> to vector<256x128xbf16>
    %cst_12 = arith.constant dense<0.000000e+00> : vector<256x128xf32>
    %15 = tpu.matmul %0, %14, %cst_12 {dimension_numbers = #tpu.dot_dimension_numbers<[1], [0], [0], [1], [0, 0, 1, 1], [], []>} : vector<256x256xbf16>, vector<256x128xbf16>, vector<256x128xf32> -> vector<256x128xf32>
    %c0_13 = arith.constant 0 : index
    %c0_14 = arith.constant 0 : index
    %16 = vector.load %arg6[%c0_13, %c0_14] : memref<1x128xf32, #tpu.memory_space<vmem>>, vector<1x128xf32>
    %17 = vector.broadcast %16 : vector<1x128xf32> to vector<256x128xf32>
    %18 = arith.addf %15, %17 : vector<256x128xf32>
    %c0_15 = arith.constant 0 : index
    %c0_16 = arith.constant 0 : index
    %19 = vector.load %arg7[%c0_15, %c0_16] : memref<256x128xf32, #tpu.memory_space<vmem>>, vector<256x128xf32>
    tpu.vector_store %arg7[%c0_15, %c0_16], %18 {strides = array<i32>} : memref<256x128xf32, #tpu.memory_space<vmem>>, vector<256x128xf32>,
    return
  }
  func.func @transform_0(%arg0: i32) -> (i32, i32) {
    %c0_i32 = arith.constant 0 : i32
    %c0_i32_0 = arith.constant 0 : i32
    %c0_i32_1 = arith.constant 0 : i32
    return %c0_i32, %c0_i32_0 : i32, i32
  }
  func.func @transform_1(%arg0: i32) -> (i32, i32) {
    %c0_i32 = arith.constant 0 : i32
    %c0_i32_0 = arith.constant 0 : i32
    %c0_i32_1 = arith.constant 0 : i32
    return %c0_i32, %c0_i32_0 : i32, i32
  }
  func.func @transform_2(%arg0: i32) -> (i32, i32) {
    %c0_i32 = arith.constant 0 : i32
    %c0_i32_0 = arith.constant 0 : i32
    %c0_i32_1 = arith.constant 0 : i32
    return %c0_i32, %c0_i32_0 : i32, i32
  }
  func.func @transform_3(%arg0: i32) -> (i32, i32) {
    %c0_i32 = arith.constant 0 : i32
    %c0_i32_0 = arith.constant 0 : i32
    %c0_i32_1 = arith.constant 0 : i32
    return %c0_i32, %c0_i32_0 : i32, i32
  }
  func.func @transform_4(%arg0: i32) -> (i32, i32) {
    %c0_i32 = arith.constant 0 : i32
    %c0_i32_0 = arith.constant 0 : i32
    %c0_i32_1 = arith.constant 0 : i32
    return %c0_i32, %c0_i32_0 : i32, i32
  }
  func.func @transform_5(%arg0: i32) -> (i32, i32) {
    %c0_i32 = arith.constant 0 : i32
    %c0_i32_0 = arith.constant 0 : i32
    %c0_i32_1 = arith.constant 0 : i32
    return %c0_i32, %c0_i32_0 : i32, i32
  }
  func.func @transform_6(%arg0: i32) -> (i32, i32) {
    %c0_i32 = arith.constant 0 : i32
    %c0_i32_0 = arith.constant 0 : i32
    %c0_i32_1 = arith.constant 0 : i32
    return %c0_i32, %c0_i32_0 : i32, i32
  }
}

</mosaic_0001>

<llo_original>
// kernel: gcn_encoder.1
$region0: #{gcn_encoder.1}
  #allocation0 [shape = 'u32[]', space=smem, size = 0x4, offset = 0x4, fixed_abs, tag = 'smem constant byte address 0x4 - core index']
  #allocation1 [shape = 'u32[144,128]{1,0:T(1,128)}', space=vmem, size = 0x12000, scoped, tag = 'internal scratch']
  %s0 = inlined_call_operand.vmem [shape: bf16[256,256], index: 0, kind: input, shape index: {}]
  %s1 = inlined_call_operand.vmem [shape: bf16[256,16], index: 1, kind: input, shape index: {}]
  %s2 = inlined_call_operand.vmem [shape: bf16[16,128], index: 2, kind: input, shape index: {}]
  %s3 = inlined_call_operand.vmem [shape: f32[1,128], index: 3, kind: input, shape index: {}]
  %s4 = inlined_call_operand.vmem [shape: bf16[128,128], index: 4, kind: input, shape index: {}]
  %s5 = inlined_call_operand.vmem [shape: f32[1,128], index: 5, kind: input, shape index: {}]
  %s6 = inlined_call_operand.vmem [shape: f32[256,128], index: 6, kind: output, shape index: {}]
  %s7 = sld [smem:[#allocation0]]
  $region34: #{gcn_encoder.1} parent=0
    _
  %s9 = ssub.s32 1, %s7
  %s10 = scalar_select 0, %s9, %s7
  // Predicated region
  $region2: #{gcn_encoder.1} parent=0 // pred_check
    _
  $region3: #{gcn_encoder.1} parent=0 // pred_check_branch
    %12 = sbr.rel (0) target = $region5
  $region4: #{gcn_encoder.1} parent=0 // pred_region
    _
  $region5: #{gcn_encoder.1} parent=0 // pred_fallthru
    _
  // Predicated region
  $region6: #{gcn_encoder.1} parent=0 // pred_check
    _
  $region7: #{gcn_encoder.1} parent=0 // pred_check_branch
    %14 = sbr.rel (0) target = $region9
  $region8: #{gcn_encoder.1} parent=0 // pred_region
    _
  $region9: #{gcn_encoder.1} parent=0 // pred_fallthru
    _
  // Predicated region
  $region10: #{gcn_encoder.1} parent=0 // pred_check
    _
  $region11: #{gcn_encoder.1} parent=0 // pred_check_branch
    %16 = sbr.rel (0) target = $region13
  $region12: #{gcn_encoder.1} parent=0 // pred_region
    _
  $region13: #{gcn_encoder.1} parent=0 // pred_fallthru
    _
  // Predicated region
  $region14: #{gcn_encoder.1} parent=0 // pred_check
    _
  $region15: #{gcn_encoder.1} parent=0 // pred_check_branch
    %18 = sbr.rel (0) target = $region17
  $region16: #{gcn_encoder.1} parent=0 // pred_region
    _
  $region17: #{gcn_encoder.1} parent=0 // pred_fallthru
    _
  // Predicated region
  $region18: #{gcn_encoder.1} parent=0 // pred_check
    _
  $region19: #{gcn_encoder.1} parent=0 // pred_check_branch
    %20 = sbr.rel (0) target = $region21
  $region20: #{gcn_encoder.1} parent=0 // pred_region
    _
  $region21: #{gcn_encoder.1} parent=0 // pred_fallthru
    _
  // Predicated region
  $region22: #{gcn_encoder.1} parent=0 // pred_check
    _
  $region23: #{gcn_encoder.1} parent=0 // pred_check_branch
    %22 = sbr.rel (0) target = $region25
  $region24: #{gcn_encoder.1} parent=0 // pred_region
    _
  $region25: #{gcn_encoder.1} parent=0 // pred_fallthru
    _
  %v24 = vld [vmem:[%s0] sm:$0xff]
  %v25 = vld [vmem:[%s0 + $0x8] sm:$0xff]
  %v26 = vld [vmem:[%s0 + $0x10] sm:$0xff]
  %v27 = vld [vmem:[%s0 + $0x18] sm:$0xff]
  %v28 = vld [vmem:[%s0 + $0x20] sm:$0xff]
  %v29 = vld [vmem:[%s0 + $0x28] sm:$0xff]
  %v30 = vld [vmem:[%s0 + $0x30] sm:$0xff]
  %v31 = vld [vmem:[%s0 + $0x38] sm:$0xff]
  %v32 = vld [vmem:[%s0 + $0x40] sm:$0xff]
  %v33 = vld [vmem:[%s0 + $0x48] sm:$0xff]
  %v34 = vld [vmem:[%s0 + $0x50] sm:$0xff]
  %v35 = vld [vmem:[%s0 + $0x58] sm:$0xff]
  %v36 = vld [vmem:[%s0 + $0x60] sm:$0xff]
  %v37 = vld [vmem:[%s0 + $0x68] sm:$0xff]
  %v38 = vld [vmem:[%s0 + $0x70] sm:$0xff]
  %v39 = vld [vmem:[%s0 + $0x78] sm:$0xff]
  %v40 = vld [vmem:[%s0 + $0x80] sm:$0xff]
  %v41 = vld [vmem:[%s0 + $0x88] sm:$0xff]
  %v42 = vld [vmem:[%s0 + $0x90] sm:$0xff]
  %v43 = vld [vmem:[%s0 + $0x98] sm:$0xff]
  %v44 = vld [vmem:[%s0 + $0xa0] sm:$0xff]
  %v45 = vld [vmem:[%s0 + $0xa8] sm:$0xff]
  %v46 = vld [vmem:[%s0 + $0xb0] sm:$0xff]
  %v47 = vld [vmem:[%s0 + $0xb8] sm:$0xff]
  %v48 = vld [vmem:[%s0 + $0xc0] sm:$0xff]
  %v49 = vld [vmem:[%s0 + $0xc8] sm:$0xff]
  %v50 = vld [vmem:[%s0 + $0xd0] sm:$0xff]
  %v51 = vld [vmem:[%s0 + $0xd8] sm:$0xff]
  %v52 = vld [vmem:[%s0 + $0xe0] sm:$0xff]
  %v53 = vld [vmem:[%s0 + $0xe8] sm:$0xff]
  %v54 = vld [vmem:[%s0 + $0xf0] sm:$0xff]
  %v55 = vld [vmem:[%s0 + $0xf8] sm:$0xff]
  %v56 = vld [vmem:[%s1] sm:$0xf]
  %v57 = vld [vmem:[%s1 + $0x4] sm:$0xf]
  %v58 = vld [vmem:[%s1 + $0x8] sm:$0xf]
  %v59 = vld [vmem:[%s1 + $0xc] sm:$0xf]
  %v60 = vld [vmem:[%s1 + $0x10] sm:$0xf]
  %v61 = vld [vmem:[%s1 + $0x14] sm:$0xf]
  %v62 = vld [vmem:[%s1 + $0x18] sm:$0xf]
  %v63 = vld [vmem:[%s1 + $0x1c] sm:$0xf]
  %v64 = vld [vmem:[%s1 + $0x20] sm:$0xf]
  %v65 = vld [vmem:[%s1 + $0x24] sm:$0xf]
  %v66 = vld [vmem:[%s1 + $0x28] sm:$0xf]
  %v67 = vld [vmem:[%s1 + $0x2c] sm:$0xf]
  %v68 = vld [vmem:[%s1 + $0x30] sm:$0xf]
  %v69 = vld [vmem:[%s1 + $0x34] sm:$0xf]
  %v70 = vld [vmem:[%s1 + $0x38] sm:$0xf]
  %v71 = vld [vmem:[%s1 + $0x3c] sm:$0xf]
  %v72 = vld [vmem:[%s1 + $0x40] sm:$0xf]
  %v73 = vld [vmem:[%s1 + $0x44] sm:$0xf]
  %v74 = vld [vmem:[%s1 + $0x48] sm:$0xf]
  %v75 = vld [vmem:[%s1 + $0x4c] sm:$0xf]
  %v76 = vld [vmem:[%s1 + $0x50] sm:$0xf]
  %v77 = vld [vmem:[%s1 + $0x54] sm:$0xf]
  %v78 = vld [vmem:[%s1 + $0x58] sm:$0xf]
  %v79 = vld [vmem:[%s1 + $0x5c] sm:$0xf]
  %v80 = vld [vmem:[%s1 + $0x60] sm:$0xf]
  %v81 = vld [vmem:[%s1 + $0x64] sm:$0xf]
  %v82 = vld [vmem:[%s1 + $0x68] sm:$0xf]
  %v83 = vld [vmem:[%s1 + $0x6c] sm:$0xf]
  %v84 = vld [vmem:[%s1 + $0x70] sm:$0xf]
  %v85 = vld [vmem:[%s1 + $0x74] sm:$0xf]
  %v86 = vld [vmem:[%s1 + $0x78] sm:$0xf]
  %v87 = vld [vmem:[%s1 + $0x7c] sm:$0xf]
  %v88 = vld [vmem:[%s2] sm:$0xf]
  %v89 = vld [vmem:[%s2 + $0x4] sm:$0xf]
  %v122 = vunpack.c.l.b16 %v56
  %v123 = vunpack.c.l.b16 %v57
  %v124 = vunpack.c.l.b16 %v58
  %v125 = vunpack.c.l.b16 %v59
  %v126 = vunpack.c.l.b16 %v60
  %v127 = vunpack.c.l.b16 %v61
  %v128 = vunpack.c.l.b16 %v62
  %v129 = vunpack.c.l.b16 %v63
  %v130 = vunpack.c.l.b16 %v64
  %v131 = vunpack.c.l.b16 %v65
  %v132 = vunpack.c.l.b16 %v66
  %v133 = vunpack.c.l.b16 %v67
  %v134 = vunpack.c.l.b16 %v68
  %v135 = vunpack.c.l.b16 %v69
  %v136 = vunpack.c.l.b16 %v70
  %v137 = vunpack.c.l.b16 %v71
  %v138 = vunpack.c.l.b16 %v72
  %v139 = vunpack.c.l.b16 %v73
  %v140 = vunpack.c.l.b16 %v74
  %v141 = vunpack.c.l.b16 %v75
  %v142 = vunpack.c.l.b16 %v76
  %v143 = vunpack.c.l.b16 %v77
  %v144 = vunpack.c.l.b16 %v78
  %v145 = vunpack.c.l.b16 %v79
  %v146 = vunpack.c.l.b16 %v80
  %v147 = vunpack.c.l.b16 %v81
  %v148 = vunpack.c.l.b16 %v82
  %v149 = vunpack.c.l.b16 %v83
  %v150 = vunpack.c.l.b16 %v84
  %v151 = vunpack.c.l.b16 %v85
  %v152 = vunpack.c.l.b16 %v86
  %v153 = vunpack.c.l.b16 %v87
  %v154 = vpack.c.b16 %v123, %v122
  %v155 = vpack.c.b16 %v125, %v124
  %v156 = vpack.c.b16 %v127, %v126
  %v157 = vpack.c.b16 %v129, %v128
  %v158 = vpack.c.b16 %v131, %v130
  %v159 = vpack.c.b16 %v133, %v132
  %v160 = vpack.c.b16 %v135, %v134
  %v161 = vpack.c.b16 %v137, %v136
  %v162 = vpack.c.b16 %v139, %v138
  %v163 = vpack.c.b16 %v141, %v140
  %v164 = vpack.c.b16 %v143, %v142
  %v165 = vpack.c.b16 %v145, %v144
  %v166 = vpack.c.b16 %v147, %v146
  %v167 = vpack.c.b16 %v149, %v148
  %v168 = vpack.c.b16 %v151, %v150
  %v169 = vpack.c.b16 %v153, %v152
  %v172 = vunpack.c.l.b16 %v88
  %v173 = vunpack.c.l.b16 %v89
  %v174 = vpack.c.b16 %v173, %v172
  %vm176 = vcmask 130048
  %v178 = vsel %vm176, %v154, 0
  %v181 = vsel %vm176, %v155, 0
  %v184 = vsel %vm176, %v156, 0
  %v187 = vsel %vm176, %v157, 0
  %v190 = vsel %vm176, %v158, 0
  %v193 = vsel %vm176, %v159, 0
  %v196 = vsel %vm176, %v160, 0
  %v199 = vsel %vm176, %v161, 0
  %v202 = vsel %vm176, %v162, 0
  %v205 = vsel %vm176, %v163, 0
  %v208 = vsel %vm176, %v164, 0
  %v211 = vsel %vm176, %v165, 0
  %v214 = vsel %vm176, %v166, 0
  %v217 = vsel %vm176, %v167, 0
  %v220 = vsel %vm176, %v168, 0
  %v223 = vsel %vm176, %v169, 0
  %225 = vmatprep.subr.bf16.mxu0 0
  %226 = vmatpush1.bf16.msra.mxu0 %v174
  %227 = vmatprep.subr.bf16.mxu0 0
  %228 = vmatpush1.bf16.msra.mxu0 0
  %229 = vmatprep.subr.bf16.mxu0 0
  %230 = vmatpush1.bf16.msra.mxu0 0
  %231 = vmatprep.subr.bf16.mxu0 0
  %232 = vmatpush1.bf16.msra.mxu0 0
  %233 = vmatprep.subr.bf16.mxu0 0
  %234 = vmatpush1.bf16.msra.mxu0 0
  %235 = vmatprep.subr.bf16.mxu0 0
  %236 = vmatpush1.bf16.msra.mxu0 0
  %237 = vmatprep.subr.bf16.mxu0 0
  %238 = vmatpush1.bf16.msra.mxu0 0
  %239 = vmatprep.subr.bf16.mxu0 0
  %240 = vmatpush1.bf16.msra.mxu0 0
  %241 = vmatprep.subr.bf16.mxu0 0
  %242 = vmatpush1.bf16.msra.mxu0 0
  %243 = vmatprep.subr.bf16.mxu0 0
  %244 = vmatpush1.bf16.msra.mxu0 0
  %245 = vmatprep.subr.bf16.mxu0 0
  %246 = vmatpush1.bf16.msra.mxu0 0
  %247 = vmatprep.subr.bf16.mxu0 0
  %248 = vmatpush1.bf16.msra.mxu0 0
  %249 = vmatprep.subr.bf16.mxu0 0
  %250 = vmatpush1.bf16.msra.mxu0 0
  %251 = vmatprep.subr.bf16.mxu0 0
  %252 = vmatpush1.bf16.msra.mxu0 0
  %253 = vmatprep.subr.bf16.mxu0 0
  %254 = vmatpush1.bf16.msra.mxu0 0
  %255 = vmatprep.subr.bf16.mxu0 0
  %256 = vmatpush1.bf16.msra.mxu0 0
  %257 = vmatprep.mubr.bf16.mxu0 0
  %258 = vmatmul.mubr.bf16.gmra.mrb[0].mxu0 %v178
  %v259 = vpop.f32.mrb[0].mxu0
  %v260 = vadd.f32 0.0, %v259
  %v261 = vpop.f32.mrb[0].mxu0
  %v262 = vpop.f32.mrb[0].mxu0
  %v263 = vadd.f32 0.0, %v262
  %v264 = vpop.f32.mrb[0].mxu0
  %265 = vmatprep.mubr.bf16.mxu0 0
  %266 = vmatmul.mubr.bf16.gmra.mrb[0].mxu0 %v181
  %v267 = vpop.f32.mrb[0].mxu0
  %v268 = vadd.f32 0.0, %v267
  %v269 = vpop.f32.mrb[0].mxu0
  %v270 = vpop.f32.mrb[0].mxu0
  %v271 = vadd.f32 0.0, %v270
  %v272 = vpop.f32.mrb[0].mxu0
  %273 = vmatprep.mubr.bf16.mxu0 0
  %274 = vmatmul.mubr.bf16.gmra.mrb[0].mxu0 %v184
  %v275 = vpop.f32.mrb[0].mxu0
  %v276 = vadd.f32 0.0, %v275
  %v277 = vpop.f32.mrb[0].mxu0
  %v278 = vpop.f32.mrb[0].mxu0
  %v279 = vadd.f32 0.0, %v278
  %v280 = vpop.f32.mrb[0].mxu0
  %281 = vmatprep.mubr.bf16.mxu0 0
  %282 = vmatmul.mubr.bf16.gmra.mrb[0].mxu0 %v187
  %v283 = vpop.f32.mrb[0].mxu0
  %v284 = vadd.f32 0.0, %v283
  %v285 = vpop.f32.mrb[0].mxu0
  %v286 = vpop.f32.mrb[0].mxu0
  %v287 = vadd.f32 0.0, %v286
  %v288 = vpop.f32.mrb[0].mxu0
  %289 = vmatprep.mubr.bf16.mxu0 0
  %290 = vmatmul.mubr.bf16.gmra.mrb[0].mxu0 %v190
  %v291 = vpop.f32.mrb[0].mxu0
  %v292 = vadd.f32 0.0, %v291
  %v293 = vpop.f32.mrb[0].mxu0
  %v294 = vpop.f32.mrb[0].mxu0
  %v295 = vadd.f32 0.0, %v294
  %v296 = vpop.f32.mrb[0].mxu0
  %297 = vmatprep.mubr.bf16.mxu0 0
  %298 = vmatmul.mubr.bf16.gmra.mrb[0].mxu0 %v193
  %v299 = vpop.f32.mrb[0].mxu0
  %v300 = vadd.f32 0.0, %v299
  %v301 = vpop.f32.mrb[0].mxu0
  %v302 = vpop.f32.mrb[0].mxu0
  %v303 = vadd.f32 0.0, %v302
  %v304 = vpop.f32.mrb[0].mxu0
  %305 = vmatprep.mubr.bf16.mxu0 0
  %306 = vmatmul.mubr.bf16.gmra.mrb[0].mxu0 %v196
  %v307 = vpop.f32.mrb[0].mxu0
  %v308 = vadd.f32 0.0, %v307
  %v309 = vpop.f32.mrb[0].mxu0
  %v310 = vpop.f32.mrb[0].mxu0
  %v311 = vadd.f32 0.0, %v310
  %v312 = vpop.f32.mrb[0].mxu0
  %313 = vmatprep.mubr.bf16.mxu0 0
  %314 = vmatmul.mubr.bf16.gmra.mrb[0].mxu0 %v199
  %v315 = vpop.f32.mrb[0].mxu0
  %v316 = vadd.f32 0.0, %v315
  %v317 = vpop.f32.mrb[0].mxu0
  %v318 = vpop.f32.mrb[0].mxu0
  %v319 = vadd.f32 0.0, %v318
  %v320 = vpop.f32.mrb[0].mxu0
  %321 = vmatprep.mubr.bf16.mxu0 0
  %322 = vmatmul.mubr.bf16.gmra.mrb[0].mxu0 %v202
  %v323 = vpop.f32.mrb[0].mxu0
  %v324 = vadd.f32 0.0, %v323
  %v325 = vpop.f32.mrb[0].mxu0
  %v326 = vpop.f32.mrb[0].mxu0
  %v327 = vadd.f32 0.0, %v326
  %v328 = vpop.f32.mrb[0].mxu0
  %329 = vmatprep.mubr.bf16.mxu0 0
  %330 = vmatmul.mubr.bf16.gmra.mrb[0].mxu0 %v205
  %v331 = vpop.f32.mrb[0].mxu0
  %v332 = vadd.f32 0.0, %v331
  %v333 = vpop.f32.mrb[0].mxu0
  %v334 = vpop.f32.mrb[0].mxu0
  %v335 = vadd.f32 0.0, %v334
  %v336 = vpop.f32.mrb[0].mxu0
  %337 = vmatprep.mubr.bf16.mxu0 0
  %338 = vmatmul.mubr.bf16.gmra.mrb[0].mxu0 %v208
  %v339 = vpop.f32.mrb[0].mxu0
  %v340 = vadd.f32 0.0, %v339
  %v341 = vpop.f32.mrb[0].mxu0
  %v342 = vpop.f32.mrb[0].mxu0
  %v343 = vadd.f32 0.0, %v342
  %v344 = vpop.f32.mrb[0].mxu0
  %345 = vmatprep.mubr.bf16.mxu0 0
  %346 = vmatmul.mubr.bf16.gmra.mrb[0].mxu0 %v211
  %v347 = vpop.f32.mrb[0].mxu0
  %v348 = vadd.f32 0.0, %v347
  %v349 = vpop.f32.mrb[0].mxu0
  %v350 = vpop.f32.mrb[0].mxu0
  %v351 = vadd.f32 0.0, %v350
  %v352 = vpop.f32.mrb[0].mxu0
  %353 = vmatprep.mubr.bf16.mxu0 0
  %354 = vmatmul.mubr.bf16.gmra.mrb[0].mxu0 %v214
  %v355 = vpop.f32.mrb[0].mxu0
  %v356 = vadd.f32 0.0, %v355
  %v357 = vpop.f32.mrb[0].mxu0
  %v358 = vpop.f32.mrb[0].mxu0
  %v359 = vadd.f32 0.0, %v358
  %v360 = vpop.f32.mrb[0].mxu0
  %361 = vmatprep.mubr.bf16.mxu0 0
  %362 = vmatmul.mubr.bf16.gmra.mrb[0].mxu0 %v217
  %v363 = vpop.f32.mrb[0].mxu0
  %v364 = vadd.f32 0.0, %v363
  %v365 = vpop.f32.mrb[0].mxu0
  %v366 = vpop.f32.mrb[0].mxu0
  %v367 = vadd.f32 0.0, %v366
  %v368 = vpop.f32.mrb[0].mxu0
  %369 = vmatprep.mubr.bf16.mxu0 0
  %370 = vmatmul.mubr.bf16.gmra.mrb[0].mxu0 %v220
  %v371 = vpop.f32.mrb[0].mxu0
  %v372 = vadd.f32 0.0, %v371
  %v373 = vpop.f32.mrb[0].mxu0
  %v374 = vpop.f32.mrb[0].mxu0
  %v375 = vadd.f32 0.0, %v374
  %v376 = vpop.f32.mrb[0].mxu0
  %377 = vmatprep.mubr.bf16.mxu0 0
  %378 = vmatmul.mubr.bf16.gmra.mrb[0].mxu0 %v223
  %v379 = vpop.f32.mrb[0].mxu0
  %v380 = vadd.f32 0.0, %v379
  %v381 = vpop.f32.mrb[0].mxu0
  %v382 = vpop.f32.mrb[0].mxu0
  %v383 = vadd.f32 0.0, %v382
  %v384 = vpop.f32.mrb[0].mxu0
  %385 = vdwg.mxu0
  %v386 = vpack.c.bf16 %v263, %v260
  %v387 = vpack.c.bf16 %v271, %v268
  %v388 = vpack.c.bf16 %v279, %v276
  %v389 = vpack.c.bf16 %v287, %v284
  %v390 = vpack.c.bf16 %v295, %v292
  %v391 = vpack.c.bf16 %v303, %v300
  %v392 = vpack.c.bf16 %v311, %v308
  %v393 = vpack.c.bf16 %v319, %v316
  %v394 = vpack.c.bf16 %v327, %v324
  %v395 = vpack.c.bf16 %v335, %v332
  %v396 = vpack.c.bf16 %v343, %v340
  %v397 = vpack.c.bf16 %v351, %v348
  %v398 = vpack.c.bf16 %v359, %v356
  %v399 = vpack.c.bf16 %v367, %v364
  %v400 = vpack.c.bf16 %v375, %v372
  %v401 = vpack.c.bf16 %v383, %v380
  %v402 = vld [vmem:[%s3] sm:$0x1]
  %v404 = vlaneseq
  %v405 = vshrl.u32 %v404, 7
  %v406 = vsub.s32 0, %v405
  %v407 = vrot.slane %v402, %v406
  %v441 = vunpack.c.l.b16 %v24
  %v442 = vunpack.c.h.b16 %v24
  %v443 = vunpack.c.l.b16 %v25
  %v444 = vunpack.c.h.b16 %v25
  %v445 = vunpack.c.l.b16 %v26
  %v446 = vunpack.c.h.b16 %v26
  %v447 = vunpack.c.l.b16 %v27
  %v448 = vunpack.c.h.b16 %v27
  %v449 = vunpack.c.l.b16 %v28
  %v450 = vunpack.c.h.b16 %v28
  %v451 = vunpack.c.l.b16 %v29
  %v452 = vunpack.c.h.b16 %v29
  %v453 = vunpack.c.l.b16 %v30
  %v454 = vunpack.c.h.b16 %v30
  %v455 = vunpack.c.l.b16 %v31
  %v456 = vunpack.c.h.b16 %v31
  %v457 = vunpack.c.l.b16 %v32
  %v458 = vunpack.c.h.b16 %v32
  %v459 = vunpack.c.l.b16 %v33
  %v460 = vunpack.c.h.b16 %v33
  %v461 = vunpack.c.l.b16 %v34
  %v462 = vunpack.c.h.b16 %v34
  %v463 = vunpack.c.l.b16 %v35
  %v464 = vunpack.c.h.b16 %v35
  %v465 = vunpack.c.l.b16 %v36
  %v466 = vunpack.c.h.b16 %v36
  %v467 = vunpack.c.l.b16 %v37
  %v468 = vunpack.c.h.b16 %v37
  %v469 = vunpack.c.l.b16 %v38
  %v470 = vunpack.c.h.b16 %v38
  %v471 = vunpack.c.l.b16 %v39
  %v472 = vunpack.c.h.b16 %v39
  %v473 = vunpack.c.l.b16 %v40
  %v474 = vunpack.c.h.b16 %v40
  %v475 = vunpack.c.l.b16 %v41
  %v476 = vunpack.c.h.b16 %v41
  %v477 = vunpack.c.l.b16 %v42
  %v478 = vunpack.c.h.b16 %v42
  %v479 = vunpack.c.l.b16 %v43
  %v480 = vunpack.c.h.b16 %v43
  %v481 = vunpack.c.l.b16 %v44
  %v482 = vunpack.c.h.b16 %v44
  %v483 = vunpack.c.l.b16 %v45
  %v484 = vunpack.c.h.b16 %v45
  %v485 = vunpack.c.l.b16 %v46
  %v486 = vunpack.c.h.b16 %v46
  %v487 = vunpack.c.l.b16 %v47
  %v488 = vunpack.c.h.b16 %v47
  %v489 = vunpack.c.l.b16 %v48
  %v490 = vunpack.c.h.b16 %v48
  %v491 = vunpack.c.l.b16 %v49
  %v492 = vunpack.c.h.b16 %v49
  %v493 = vunpack.c.l.b16 %v50
  %v494 = vunpack.c.h.b16 %v50
  %v495 = vunpack.c.l.b16 %v51
  %v496 = vunpack.c.h.b16 %v51
  %v497 = vunpack.c.l.b16 %v52
  %v498 = vunpack.c.h.b16 %v52
  %v499 = vunpack.c.l.b16 %v53
  %v500 = vunpack.c.h.b16 %v53
  %v501 = vunpack.c.l.b16 %v54
  %v502 = vunpack.c.h.b16 %v54
  %v503 = vunpack.c.l.b16 %v55
  %v504 = vunpack.c.h.b16 %v55
  %v505 = vpack.c.b16 %v443, %v441
  %v506 = vpack.c.b16 %v444, %v442
  %v507 = vpack.c.b16 %v447, %v445
  %v508 = vpack.c.b16 %v448, %v446
  %v509 = vpack.c.b16 %v451, %v449
  %v510 = vpack.c.b16 %v452, %v450
  %v511 = vpack.c.b16 %v455, %v453
  %v512 = vpack.c.b16 %v456, %v454
  %v513 = vpack.c.b16 %v459, %v457
  %v514 = vpack.c.b16 %v460, %v458
  %v515 = vpack.c.b16 %v463, %v461
  %v516 = vpack.c.b16 %v464, %v462
  %v517 = vpack.c.b16 %v467, %v465
  %v518 = vpack.c.b16 %v468, %v466
  %v519 = vpack.c.b16 %v471, %v469
  %v520 = vpack.c.b16 %v472, %v470
  %v521 = vpack.c.b16 %v475, %v473
  %v522 = vpack.c.b16 %v476, %v474
  %v523 = vpack.c.b16 %v479, %v477
  %v524 = vpack.c.b16 %v480, %v478
  %v525 = vpack.c.b16 %v483, %v481
  %v526 = vpack.c.b16 %v484, %v482
  %v527 = vpack.c.b16 %v487, %v485
  %v528 = vpack.c.b16 %v488, %v486
  %v529 = vpack.c.b16 %v491, %v489
  %v530 = vpack.c.b16 %v492, %v490
  %v531 = vpack.c.b16 %v495, %v493
  %v532 = vpack.c.b16 %v496, %v494
  %v533 = vpack.c.b16 %v499, %v497
  %v534 = vpack.c.b16 %v500, %v498
  %v535 = vpack.c.b16 %v503, %v501
  %v536 = vpack.c.b16 %v504, %v502
  %569 = vmatprep.subr.bf16.mxu0 0
  %570 = vmatpush1.bf16.msra.mxu0 %v386
  %571 = vmatprep.subr.bf16.mxu0 0
  %572 = vmatpush1.bf16.msra.mxu0 %v387
  %573 = vmatprep.subr.bf16.mxu0 0
  %574 = vmatpush1.bf16.msra.mxu0 %v388
  %575 = vmatprep.subr.bf16.mxu0 0
  %576 = vmatpush1.bf16.msra.mxu0 %v389
  %577 = vmatprep.subr.bf16.mxu0 0
  %578 = vmatpush1.bf16.msra.mxu0 %v390
  %579 = vmatprep.subr.bf16.mxu0 0
  %580 = vmatpush1.bf16.msra.mxu0 %v391
  %581 = vmatprep.subr.bf16.mxu0 0
  %582 = vmatpush1.bf16.msra.mxu0 %v392
  %583 = vmatprep.subr.bf16.mxu0 0
  %584 = vmatpush1.bf16.msra.mxu0 %v393
  %585 = vmatprep.subr.bf16.mxu0 0
  %586 = vmatpush1.bf16.msra.mxu0 %v394
  %587 = vmatprep.subr.bf16.mxu0 0
  %588 = vmatpush1.bf16.msra.mxu0 %v395
  %589 = vmatprep.subr.bf16.mxu0 0
  %590 = vmatpush1.bf16.msra.mxu0 %v396
  %591 = vmatprep.subr.bf16.mxu0 0
  %592 = vmatpush1.bf16.msra.mxu0 %v397
  %593 = vmatprep.subr.bf16.mxu0 0
  %594 = vmatpush1.bf16.msra.mxu0 %v398
  %595 = vmatprep.subr.bf16.mxu0 0
  %596 = vmatpush1.bf16.msra.mxu0 %v399
  %597 = vmatprep.subr.bf16.mxu0 0
  %598 = vmatpush1.bf16.msra.mxu0 %v400
  %599 = vmatprep.subr.bf16.mxu0 0
  %600 = vmatpush1.bf16.msra.mxu0 %v401
  %601 = vmatprep.mubr.bf16.mxu0 %v506
  %602 = vmatmul.mubr.bf16.gmra.mrb[0].mxu0 %v505
  %v603 = vpop.f32.mrb[0].mxu0
  %v604 = vadd.f32 %v407, %v603
  %v605 = vpop.f32.mrb[0].mxu0
  %v606 = vpop.f32.mrb[0].mxu0
  %v607 = vadd.f32 %v407, %v606
  %v608 = vpop.f32.mrb[0].mxu0
  %609 = vmatprep.mubr.bf16.mxu0 %v508
  %610 = vmatmul.mubr.bf16.gmra.mrb[0].mxu0 %v507
  %v611 = vpop.f32.mrb[0].mxu0
  %v612 = vadd.f32 %v407, %v611
  %v613 = vpop.f32.mrb[0].mxu0
  %v614 = vpop.f32.mrb[0].mxu0
  %v615 = vadd.f32 %v407, %v614
  %v616 = vpop.f32.mrb[0].mxu0
  %617 = vmatprep.mubr.bf16.mxu0 %v510
  %618 = vmatmul.mubr.bf16.gmra.mrb[0].mxu0 %v509
  %v619 = vpop.f32.mrb[0].mxu0
  %v620 = vadd.f32 %v407, %v619
  %v621 = vpop.f32.mrb[0].mxu0
  %v622 = vpop.f32.mrb[0].mxu0
  %v623 = vadd.f32 %v407, %v622
  %v624 = vpop.f32.mrb[0].mxu0
  %625 = vmatprep.mubr.bf16.mxu0 %v512
  %626 = vmatmul.mubr.bf16.gmra.mrb[0].mxu0 %v511
  %v627 = vpop.f32.mrb[0].mxu0
  %v628 = vadd.f32 %v407, %v627
  %v629 = vpop.f32.mrb[0].mxu0
  %v630 = vpop.f32.mrb[0].mxu0
  %v631 = vadd.f32 %v407, %v630
  %v632 = vpop.f32.mrb[0].mxu0
  %633 = vmatprep.mubr.bf16.mxu0 %v514
  %634 = vmatmul.mubr.bf16.gmra.mrb[0].mxu0 %v513
  %v635 = vpop.f32.mrb[0].mxu0
  %v636 = vadd.f32 %v407, %v635
  %v637 = vpop.f32.mrb[0].mxu0
  %v638 = vpop.f32.mrb[0].mxu0
  %v639 = vadd.f32 %v407, %v638
  %v640 = vpop.f32.mrb[0].mxu0
  %641 = vmatprep.mubr.bf16.mxu0 %v516
  %642 = vmatmul.mubr.bf16.gmra.mrb[0].mxu0 %v515
  %v643 = vpop.f32.mrb[0].mxu0
  %v644 = vadd.f32 %v407, %v643
  %v645 = vpop.f32.mrb[0].mxu0
  %v646 = vpop.f32.mrb[0].mxu0
  %v647 = vadd.f32 %v407, %v646
  %v648 = vpop.f32.mrb[0].mxu0
  %649 = vmatprep.mubr.bf16.mxu0 %v518
  %650 = vmatmul.mubr.bf16.gmra.mrb[0].mxu0 %v517
  %v651 = vpop.f32.mrb[0].mxu0
  %v652 = vadd.f32 %v407, %v651
  %v653 = vpop.f32.mrb[0].mxu0
  %v654 = vpop.f32.mrb[0].mxu0
  %v655 = vadd.f32 %v407, %v654
  %v656 = vpop.f32.mrb[0].mxu0
  %657 = vmatprep.mubr.bf16.mxu0 %v520
  %658 = vmatmul.mubr.bf16.gmra.mrb[0].mxu0 %v519
  %v659 = vpop.f32.mrb[0].mxu0
  %v660 = vadd.f32 %v407, %v659
  %v661 = vpop.f32.mrb[0].mxu0
  %v662 = vpop.f32.mrb[0].mxu0
  %v663 = vadd.f32 %v407, %v662
  %v664 = vpop.f32.mrb[0].mxu0
  %665 = vmatprep.mubr.bf16.mxu0 %v522
  %666 = vmatmul.mubr.bf16.gmra.mrb[0].mxu0 %v521
  %v667 = vpop.f32.mrb[0].mxu0
  %v668 = vadd.f32 %v407, %v667
  %v669 = vpop.f32.mrb[0].mxu0
  %v670 = vpop.f32.mrb[0].mxu0
  %v671 = vadd.f32 %v407, %v670
  %v672 = vpop.f32.mrb[0].mxu0
  %673 = vmatprep.mubr.bf16.mxu0 %v524
  %674 = vmatmul.mubr.bf16.gmra.mrb[0].mxu0 %v523
  %v675 = vpop.f32.mrb[0].mxu0
  %v676 = vadd.f32 %v407, %v675
  %v677 = vpop.f32.mrb[0].mxu0
  %v678 = vpop.f32.mrb[0].mxu0
  %v679 = vadd.f32 %v407, %v678
  %v680 = vpop.f32.mrb[0].mxu0
  %681 = vmatprep.mubr.bf16.mxu0 %v526
  %682 = vmatmul.mubr.bf16.gmra.mrb[0].mxu0 %v525
  %v683 = vpop.f32.mrb[0].mxu0
  %v684 = vadd.f32 %v407, %v683
  %v685 = vpop.f32.mrb[0].mxu0
  %v686 = vpop.f32.mrb[0].mxu0
  %v687 = vadd.f32 %v407, %v686
  %v688 = vpop.f32.mrb[0].mxu0
  %689 = vmatprep.mubr.bf16.mxu0 %v528
  %690 = vmatmul.mubr.bf16.gmra.mrb[0].mxu0 %v527
  %v691 = vpop.f32.mrb[0].mxu0
  %v692 = vadd.f32 %v407, %v691
  %v693 = vpop.f32.mrb[0].mxu0
  %v694 = vpop.f32.mrb[0].mxu0
  %v695 = vadd.f32 %v407, %v694
  %v696 = vpop.f32.mrb[0].mxu0
  %697 = vmatprep.mubr.bf16.mxu0 %v530
  %698 = vmatmul.mubr.bf16.gmra.mrb[0].mxu0 %v529
  %v699 = vpop.f32.mrb[0].mxu0
  %v700 = vadd.f32 %v407, %v699
  %v701 = vpop.f32.mrb[0].mxu0
  %v702 = vpop.f32.mrb[0].mxu0
  %v703 = vadd.f32 %v407, %v702
  %v704 = vpop.f32.mrb[0].mxu0
  %705 = vmatprep.mubr.bf16.mxu0 %v532
  %706 = vmatmul.mubr.bf16.gmra.mrb[0].mxu0 %v531
  %v707 = vpop.f32.mrb[0].mxu0
  %v708 = vadd.f32 %v407, %v707
  %v709 = vpop.f32.mrb[0].mxu0
  %v710 = vpop.f32.mrb[0].mxu0
  %v711 = vadd.f32 %v407, %v710
  %v712 = vpop.f32.mrb[0].mxu0
  %713 = vmatprep.mubr.bf16.mxu0 %v534
  %714 = vmatmul.mubr.bf16.gmra.mrb[0].mxu0 %v533
  %v715 = vpop.f32.mrb[0].mxu0
  %v716 = vadd.f32 %v407, %v715
  %v717 = vpop.f32.mrb[0].mxu0
  %v718 = vpop.f32.mrb[0].mxu0
  %v719 = vadd.f32 %v407, %v718
  %v720 = vpop.f32.mrb[0].mxu0
  %721 = vmatprep.mubr.bf16.mxu0 %v536
  %722 = vmatmul.mubr.bf16.gmra.mrb[0].mxu0 %v535
  %v723 = vpop.f32.mrb[0].mxu0
  %v724 = vadd.f32 %v407, %v723
  %v725 = vpop.f32.mrb[0].mxu0
  %v726 = vpop.f32.mrb[0].mxu0
  %v727 = vadd.f32 %v407, %v726
  %v728 = vpop.f32.mrb[0].mxu0
  %729 = vdwg.mxu0
  %v730 = vmax.f32 %v604, 0.0
  %v731 = vmax.f32 %v607, 0.0
  %v732 = vmax.f32 %v612, 0.0
  %v733 = vmax.f32 %v615, 0.0
  %v734 = vmax.f32 %v620, 0.0
  %v735 = vmax.f32 %v623, 0.0
  %v736 = vmax.f32 %v628, 0.0
  %v737 = vmax.f32 %v631, 0.0
  %v738 = vmax.f32 %v636, 0.0
  %v739 = vmax.f32 %v639, 0.0
  %v740 = vmax.f32 %v644, 0.0
  %v741 = vmax.f32 %v647, 0.0
  %v742 = vmax.f32 %v652, 0.0
  %v743 = vmax.f32 %v655, 0.0
  %v744 = vmax.f32 %v660, 0.0
  %v745 = vmax.f32 %v663, 0.0
  %v746 = vmax.f32 %v668, 0.0
  %v747 = vmax.f32 %v671, 0.0
  %v748 = vmax.f32 %v676, 0.0
  %v749 = vmax.f32 %v679, 0.0
  %v750 = vmax.f32 %v684, 0.0
  %v751 = vmax.f32 %v687, 0.0
  %v752 = vmax.f32 %v692, 0.0
  %v753 = vmax.f32 %v695, 0.0
  %v754 = vmax.f32 %v700, 0.0
  %v755 = vmax.f32 %v703, 0.0
  %v756 = vmax.f32 %v708, 0.0
  %v757 = vmax.f32 %v711, 0.0
  %v758 = vmax.f32 %v716, 0.0
  %v759 = vmax.f32 %v719, 0.0
  %v760 = vmax.f32 %v724, 0.0
  %v761 = vmax.f32 %v727, 0.0
  %v762 = vpack.c.bf16 %v731, %v730
  %v763 = vpack.c.bf16 %v733, %v732
  %v764 = vpack.c.bf16 %v735, %v734
  %v765 = vpack.c.bf16 %v737, %v736
  %v766 = vpack.c.bf16 %v739, %v738
  %v767 = vpack.c.bf16 %v741, %v740
  %v768 = vpack.c.bf16 %v743, %v742
  %v769 = vpack.c.bf16 %v745, %v744
  %v770 = vpack.c.bf16 %v747, %v746
  %v771 = vpack.c.bf16 %v749, %v748
  %v772 = vpack.c.bf16 %v751, %v750
  %v773 = vpack.c.bf16 %v753, %v752
  %v774 = vpack.c.bf16 %v755, %v754
  %v775 = vpack.c.bf16 %v757, %v756
  %v776 = vpack.c.bf16 %v759, %v758
  %v777 = vpack.c.bf16 %v761, %v760
  %v778 = vld [vmem:[%s4] sm:$0xf]
  %v779 = vld [vmem:[%s4 + $0x4] sm:$0xf]
  %v780 = vld [vmem:[%s4 + $0x8] sm:$0xf]
  %v781 = vld [vmem:[%s4 + $0xc] sm:$0xf]
  %v782 = vld [vmem:[%s4 + $0x10] sm:$0xf]
  %v783 = vld [vmem:[%s4 + $0x14] sm:$0xf]
  %v784 = vld [vmem:[%s4 + $0x18] sm:$0xf]
  %v785 = vld [vmem:[%s4 + $0x1c] sm:$0xf]
  %v786 = vld [vmem:[%s4 + $0x20] sm:$0xf]
  %v787 = vld [vmem:[%s4 + $0x24] sm:$0xf]
  %v788 = vld [vmem:[%s4 + $0x28] sm:$0xf]
  %v789 = vld [vmem:[%s4 + $0x2c] sm:$0xf]
  %v790 = vld [vmem:[%s4 + $0x30] sm:$0xf]
  %v791 = vld [vmem:[%s4 + $0x34] sm:$0xf]
  %v792 = vld [vmem:[%s4 + $0x38] sm:$0xf]
  %v793 = vld [vmem:[%s4 + $0x3c] sm:$0xf]
  %v810 = vunpack.c.l.b16 %v778
  %v811 = vunpack.c.l.b16 %v779
  %v812 = vunpack.c.l.b16 %v780
  %v813 = vunpack.c.l.b16 %v781
  %v814 = vunpack.c.l.b16 %v782
  %v815 = vunpack.c.l.b16 %v783
  %v816 = vunpack.c.l.b16 %v784
  %v817 = vunpack.c.l.b16 %v785
  %v818 = vunpack.c.l.b16 %v786
  %v819 = vunpack.c.l.b16 %v787
  %v820 = vunpack.c.l.b16 %v788
  %v821 = vunpack.c.l.b16 %v789
  %v822 = vunpack.c.l.b16 %v790
  %v823 = vunpack.c.l.b16 %v791
  %v824 = vunpack.c.l.b16 %v792
  %v825 = vunpack.c.l.b16 %v793
  %v826 = vpack.c.b16 %v811, %v810
  %v827 = vpack.c.b16 %v813, %v812
  %v828 = vpack.c.b16 %v815, %v814
  %v829 = vpack.c.b16 %v817, %v816
  %v830 = vpack.c.b16 %v819, %v818
  %v831 = vpack.c.b16 %v821, %v820
  %v832 = vpack.c.b16 %v823, %v822
  %v833 = vpack.c.b16 %v825, %v824
  %842 = vmatprep.subr.bf16.mxu0 0
  %843 = vmatpush1.bf16.msra.mxu0 %v826
  %844 = vmatprep.subr.bf16.mxu0 0
  %845 = vmatpush1.bf16.msra.mxu0 %v827
  %846 = vmatprep.subr.bf16.mxu0 0
  %847 = vmatpush1.bf16.msra.mxu0 %v828
  %848 = vmatprep.subr.bf16.mxu0 0
  %849 = vmatpush1.bf16.msra.mxu0 %v829
  %850 = vmatprep.subr.bf16.mxu0 0
  %851 = vmatpush1.bf16.msra.mxu0 %v830
  %852 = vmatprep.subr.bf16.mxu0 0
  %853 = vmatpush1.bf16.msra.mxu0 %v831
  %854 = vmatprep.subr.bf16.mxu0 0
  %855 = vmatpush1.bf16.msra.mxu0 %v832
  %856 = vmatprep.subr.bf16.mxu0 0
  %857 = vmatpush1.bf16.msra.mxu0 %v833
  %858 = vmatprep.subr.bf16.mxu0 0
  %859 = vmatpush1.bf16.msra.mxu0 0
  %860 = vmatprep.subr.bf16.mxu0 0
  %861 = vmatpush1.bf16.msra.mxu0 0
  %862 = vmatprep.subr.bf16.mxu0 0
  %863 = vmatpush1.bf16.msra.mxu0 0
  %864 = vmatprep.subr.bf16.mxu0 0
  %865 = vmatpush1.bf16.msra.mxu0 0
  %866 = vmatprep.subr.bf16.mxu0 0
  %867 = vmatpush1.bf16.msra.mxu0 0
  %868 = vmatprep.subr.bf16.mxu0 0
  %869 = vmatpush1.bf16.msra.mxu0 0
  %870 = vmatprep.subr.bf16.mxu0 0
  %871 = vmatpush1.bf16.msra.mxu0 0
  %872 = vmatprep.subr.bf16.mxu0 0
  %873 = vmatpush1.bf16.msra.mxu0 0
  %874 = vmatprep.mubr.bf16.mxu0 0
  %875 = vmatmul.mubr.bf16.gmra.mrb[0].mxu0 %v762
  %v876 = vpop.f32.mrb[0].mxu0
  %v877 = vadd.f32 0.0, %v876
  %v878 = vpop.f32.mrb[0].mxu0
  %v879 = vpop.f32.mrb[0].mxu0
  %v880 = vadd.f32 0.0, %v879
  %v881 = vpop.f32.mrb[0].mxu0
  %882 = vmatprep.mubr.bf16.mxu0 0
  %883 = vmatmul.mubr.bf16.gmra.mrb[0].mxu0 %v763
  %v884 = vpop.f32.mrb[0].mxu0
  %v885 = vadd.f32 0.0, %v884
  %v886 = vpop.f32.mrb[0].mxu0
  %v887 = vpop.f32.mrb[0].mxu0
  %v888 = vadd.f32 0.0, %v887
  %v889 = vpop.f32.mrb[0].mxu0
  %890 = vmatprep.mubr.bf16.mxu0 0
  %891 = vmatmul.mubr.bf16.gmra.mrb[0].mxu0 %v764
  %v892 = vpop.f32.mrb[0].mxu0
  %v893 = vadd.f32 0.0, %v892
  %v894 = vpop.f32.mrb[0].mxu0
  %v895 = vpop.f32.mrb[0].mxu0
  %v896 = vadd.f32 0.0, %v895
  %v897 = vpop.f32.mrb[0].mxu0
  %898 = vmatprep.mubr.bf16.mxu0 0
  %899 = vmatmul.mubr.bf16.gmra.mrb[0].mxu0 %v765
  %v900 = vpop.f32.mrb[0].mxu0
  %v901 = vadd.f32 0.0, %v900
  %v902 = vpop.f32.mrb[0].mxu0
  %v903 = vpop.f32.mrb[0].mxu0
  %v904 = vadd.f32 0.0, %v903
  %v905 = vpop.f32.mrb[0].mxu0
  %906 = vmatprep.mubr.bf16.mxu0 0
  %907 = vmatmul.mubr.bf16.gmra.mrb[0].mxu0 %v766
  %v908 = vpop.f32.mrb[0].mxu0
  %v909 = vadd.f32 0.0, %v908
  %v910 = vpop.f32.mrb[0].mxu0
  %v911 = vpop.f32.mrb[0].mxu0
  %v912 = vadd.f32 0.0, %v911
  %v913 = vpop.f32.mrb[0].mxu0
  %914 = vmatprep.mubr.bf16.mxu0 0
  %915 = vmatmul.mubr.bf16.gmra.mrb[0].mxu0 %v767
  %v916 = vpop.f32.mrb[0].mxu0
  %v917 = vadd.f32 0.0, %v916
  %v918 = vpop.f32.mrb[0].mxu0
  %v919 = vpop.f32.mrb[0].mxu0
  %v920 = vadd.f32 0.0, %v919
  %v921 = vpop.f32.mrb[0].mxu0
  %922 = vmatprep.mubr.bf16.mxu0 0
  %923 = vmatmul.mubr.bf16.gmra.mrb[0].mxu0 %v768
  %v924 = vpop.f32.mrb[0].mxu0
  %v925 = vadd.f32 0.0, %v924
  %v926 = vpop.f32.mrb[0].mxu0
  %v927 = vpop.f32.mrb[0].mxu0
  %v928 = vadd.f32 0.0, %v927
  %v929 = vpop.f32.mrb[0].mxu0
  %930 = vmatprep.mubr.bf16.mxu0 0
  %931 = vmatmul.mubr.bf16.gmra.mrb[0].mxu0 %v769
  %v932 = vpop.f32.mrb[0].mxu0
  %v933 = vadd.f32 0.0, %v932
  %v934 = vpop.f32.mrb[0].mxu0
  %v935 = vpop.f32.mrb[0].mxu0
  %v936 = vadd.f32 0.0, %v935
  %v937 = vpop.f32.mrb[0].mxu0
  %938 = vmatprep.mubr.bf16.mxu0 0
  %939 = vmatmul.mubr.bf16.gmra.mrb[0].mxu0 %v770
  %v940 = vpop.f32.mrb[0].mxu0
  %v941 = vadd.f32 0.0, %v940
  %v942 = vpop.f32.mrb[0].mxu0
  %v943 = vpop.f32.mrb[0].mxu0
  %v944 = vadd.f32 0.0, %v943
  %v945 = vpop.f32.mrb[0].mxu0
  %946 = vmatprep.mubr.bf16.mxu0 0
  %947 = vmatmul.mubr.bf16.gmra.mrb[0].mxu0 %v771
  %v948 = vpop.f32.mrb[0].mxu0
  %v949 = vadd.f32 0.0, %v948
  %v950 = vpop.f32.mrb[0].mxu0
  %v951 = vpop.f32.mrb[0].mxu0
  %v952 = vadd.f32 0.0, %v951
  %v953 = vpop.f32.mrb[0].mxu0
  %954 = vmatprep.mubr.bf16.mxu0 0
  %955 = vmatmul.mubr.bf16.gmra.mrb[0].mxu0 %v772
  %v956 = vpop.f32.mrb[0].mxu0
  %v957 = vadd.f32 0.0, %v956
  %v958 = vpop.f32.mrb[0].mxu0
  %v959 = vpop.f32.mrb[0].mxu0
  %v960 = vadd.f32 0.0, %v959
  %v961 = vpop.f32.mrb[0].mxu0
  %962 = vmatprep.mubr.bf16.mxu0 0
  %963 = vmatmul.mubr.bf16.gmra.mrb[0].mxu0 %v773
  %v964 = vpop.f32.mrb[0].mxu0
  %v965 = vadd.f32 0.0, %v964
  %v966 = vpop.f32.mrb[0].mxu0
  %v967 = vpop.f32.mrb[0].mxu0
  %v968 = vadd.f32 0.0, %v967
  %v969 = vpop.f32.mrb[0].mxu0
  %970 = vmatprep.mubr.bf16.mxu0 0
  %971 = vmatmul.mubr.bf16.gmra.mrb[0].mxu0 %v774
  %v972 = vpop.f32.mrb[0].mxu0
  %v973 = vadd.f32 0.0, %v972
  %v974 = vpop.f32.mrb[0].mxu0
  %v975 = vpop.f32.mrb[0].mxu0
  %v976 = vadd.f32 0.0, %v975
  %v977 = vpop.f32.mrb[0].mxu0
  %978 = vmatprep.mubr.bf16.mxu0 0
  %979 = vmatmul.mubr.bf16.gmra.mrb[0].mxu0 %v775
  %v980 = vpop.f32.mrb[0].mxu0
  %v981 = vadd.f32 0.0, %v980
  %v982 = vpop.f32.mrb[0].mxu0
  %v983 = vpop.f32.mrb[0].mxu0
  %v984 = vadd.f32 0.0, %v983
  %v985 = vpop.f32.mrb[0].mxu0
  %986 = vmatprep.mubr.bf16.mxu0 0
  %987 = vmatmul.mubr.bf16.gmra.mrb[0].mxu0 %v776
  %v988 = vpop.f32.mrb[0].mxu0
  %v989 = vadd.f32 0.0, %v988
  %v990 = vpop.f32.mrb[0].mxu0
  %v991 = vpop.f32.mrb[0].mxu0
  %v992 = vadd.f32 0.0, %v991
  %v993 = vpop.f32.mrb[0].mxu0
  %994 = vmatprep.mubr.bf16.mxu0 0
  %995 = vmatmul.mubr.bf16.gmra.mrb[0].mxu0 %v777
  %v996 = vpop.f32.mrb[0].mxu0
  %v997 = vadd.f32 0.0, %v996
  %v998 = vpop.f32.mrb[0].mxu0
  %v999 = vpop.f32.mrb[0].mxu0
  %v1000 = vadd.f32 0.0, %v999
  %v1001 = vpop.f32.mrb[0].mxu0
  %1002 = vdwg.mxu0
  %v1003 = vpack.c.bf16 %v880, %v877
  %v1004 = vpack.c.bf16 %v888, %v885
  %v1005 = vpack.c.bf16 %v896, %v893
  %v1006 = vpack.c.bf16 %v904, %v901
  %v1007 = vpack.c.bf16 %v912, %v909
  %v1008 = vpack.c.bf16 %v920, %v917
  %v1009 = vpack.c.bf16 %v928, %v925
  %v1010 = vpack.c.bf16 %v936, %v933
  %v1011 = vpack.c.bf16 %v944, %v941
  %v1012 = vpack.c.bf16 %v952, %v949
  %v1013 = vpack.c.bf16 %v960, %v957
  %v1014 = vpack.c.bf16 %v968, %v965
  %v1015 = vpack.c.bf16 %v976, %v973
  %v1016 = vpack.c.bf16 %v984, %v981
  %v1017 = vpack.c.bf16 %v992, %v989
  %v1018 = vpack.c.bf16 %v1000, %v997
  %v1019 = vld [vmem:[%s5] sm:$0x1]
  %v1021 = vlaneseq
  %v1022 = vshrl.u32 %v1021, 7
  %v1023 = vsub.s32 0, %v1022
  %v1024 = vrot.slane %v1019, %v1023
  %1026 = vmatprep.subr.bf16.mxu0 0
  %1027 = vmatpush1.bf16.msra.mxu0 %v1003
  %1028 = vmatprep.subr.bf16.mxu0 0
  %1029 = vmatpush1.bf16.msra.mxu0 %v1004
  %1030 = vmatprep.subr.bf16.mxu0 0
  %1031 = vmatpush1.bf16.msra.mxu0 %v1005
  %1032 = vmatprep.subr.bf16.mxu0 0
  %1033 = vmatpush1.bf16.msra.mxu0 %v1006
  %1034 = vmatprep.subr.bf16.mxu0 0
  %1035 = vmatpush1.bf16.msra.mxu0 %v1007
  %1036 = vmatprep.subr.bf16.mxu0 0
  %1037 = vmatpush1.bf16.msra.mxu0 %v1008
  %1038 = vmatprep.subr.bf16.mxu0 0
  %1039 = vmatpush1.bf16.msra.mxu0 %v1009
  %1040 = vmatprep.subr.bf16.mxu0 0
  %1041 = vmatpush1.bf16.msra.mxu0 %v1010
  %1042 = vmatprep.subr.bf16.mxu0 0
  %1043 = vmatpush1.bf16.msra.mxu0 %v1011
  %1044 = vmatprep.subr.bf16.mxu0 0
  %1045 = vmatpush1.bf16.msra.mxu0 %v1012
  %1046 = vmatprep.subr.bf16.mxu0 0
  %1047 = vmatpush1.bf16.msra.mxu0 %v1013
  %1048 = vmatprep.subr.bf16.mxu0 0
  %1049 = vmatpush1.bf16.msra.mxu0 %v1014
  %1050 = vmatprep.subr.bf16.mxu0 0
  %1051 = vmatpush1.bf16.msra.mxu0 %v1015
  %1052 = vmatprep.subr.bf16.mxu0 0
  %1053 = vmatpush1.bf16.msra.mxu0 %v1016
  %1054 = vmatprep.subr.bf16.mxu0 0
  %1055 = vmatpush1.bf16.msra.mxu0 %v1017
  %1056 = vmatprep.subr.bf16.mxu0 0
  %1057 = vmatpush1.bf16.msra.mxu0 %v1018
  %1058 = vmatprep.mubr.bf16.mxu0 %v506
  %1059 = vmatmul.mubr.bf16.gmra.mrb[0].mxu0 %v505
  %v1060 = vpop.f32.mrb[0].mxu0
  %v1061 = vadd.f32 %v1024, %v1060
  %v1062 = vpop.f32.mrb[0].mxu0
  %v1063 = vpop.f32.mrb[0].mxu0
  %v1064 = vadd.f32 %v1024, %v1063
  %v1065 = vpop.f32.mrb[0].mxu0
  %1066 = vmatprep.mubr.bf16.mxu0 %v508
  %1067 = vmatmul.mubr.bf16.gmra.mrb[0].mxu0 %v507
  %v1068 = vpop.f32.mrb[0].mxu0
  %v1069 = vadd.f32 %v1024, %v1068
  %v1070 = vpop.f32.mrb[0].mxu0
  %v1071 = vpop.f32.mrb[0].mxu0
  %v1072 = vadd.f32 %v1024, %v1071
  %v1073 = vpop.f32.mrb[0].mxu0
  %1074 = vmatprep.mubr.bf16.mxu0 %v510
  %1075 = vmatmul.mubr.bf16.gmra.mrb[0].mxu0 %v509
  %v1076 = vpop.f32.mrb[0].mxu0
  %v1077 = vadd.f32 %v1024, %v1076
  %v1078 = vpop.f32.mrb[0].mxu0
  %v1079 = vpop.f32.mrb[0].mxu0
  %v1080 = vadd.f32 %v1024, %v1079
  %v1081 = vpop.f32.mrb[0].mxu0
  %1082 = vmatprep.mubr.bf16.mxu0 %v512
  %1083 = vmatmul.mubr.bf16.gmra.mrb[0].mxu0 %v511
  %v1084 = vpop.f32.mrb[0].mxu0
  %v1085 = vadd.f32 %v1024, %v1084
  %v1086 = vpop.f32.mrb[0].mxu0
  %v1087 = vpop.f32.mrb[0].mxu0
  %v1088 = vadd.f32 %v1024, %v1087
  %v1089 = vpop.f32.mrb[0].mxu0
  %1090 = vmatprep.mubr.bf16.mxu0 %v514
  %1091 = vmatmul.mubr.bf16.gmra.mrb[0].mxu0 %v513
  %v1092 = vpop.f32.mrb[0].mxu0
  %v1093 = vadd.f32 %v1024, %v1092
  %v1094 = vpop.f32.mrb[0].mxu0
  %v1095 = vpop.f32.mrb[0].mxu0
  %v1096 = vadd.f32 %v1024, %v1095
  %v1097 = vpop.f32.mrb[0].mxu0
  %1098 = vmatprep.mubr.bf16.mxu0 %v516
  %1099 = vmatmul.mubr.bf16.gmra.mrb[0].mxu0 %v515
  %v1100 = vpop.f32.mrb[0].mxu0
  %v1101 = vadd.f32 %v1024, %v1100
  %v1102 = vpop.f32.mrb[0].mxu0
  %v1103 = vpop.f32.mrb[0].mxu0
  %v1104 = vadd.f32 %v1024, %v1103
  %v1105 = vpop.f32.mrb[0].mxu0
  %1106 = vmatprep.mubr.bf16.mxu0 %v518
  %1107 = vmatmul.mubr.bf16.gmra.mrb[0].mxu0 %v517
  %v1108 = vpop.f32.mrb[0].mxu0
  %v1109 = vadd.f32 %v1024, %v1108
  %v1110 = vpop.f32.mrb[0].mxu0
  %v1111 = vpop.f32.mrb[0].mxu0
  %v1112 = vadd.f32 %v1024, %v1111
  %v1113 = vpop.f32.mrb[0].mxu0
  %1114 = vmatprep.mubr.bf16.mxu0 %v520
  %1115 = vmatmul.mubr.bf16.gmra.mrb[0].mxu0 %v519
  %v1116 = vpop.f32.mrb[0].mxu0
  %v1117 = vadd.f32 %v1024, %v1116
  %v1118 = vpop.f32.mrb[0].mxu0
  %v1119 = vpop.f32.mrb[0].mxu0
  %v1120 = vadd.f32 %v1024, %v1119
  %v1121 = vpop.f32.mrb[0].mxu0
  %1122 = vmatprep.mubr.bf16.mxu0 %v522
  %1123 = vmatmul.mubr.bf16.gmra.mrb[0].mxu0 %v521
  %v1124 = vpop.f32.mrb[0].mxu0
  %v1125 = vadd.f32 %v1024, %v1124
  %v1126 = vpop.f32.mrb[0].mxu0
  %v1127 = vpop.f32.mrb[0].mxu0
  %v1128 = vadd.f32 %v1024, %v1127
  %v1129 = vpop.f32.mrb[0].mxu0
  %1130 = vmatprep.mubr.bf16.mxu0 %v524
  %1131 = vmatmul.mubr.bf16.gmra.mrb[0].mxu0 %v523
  %v1132 = vpop.f32.mrb[0].mxu0
  %v1133 = vadd.f32 %v1024, %v1132
  %v1134 = vpop.f32.mrb[0].mxu0
  %v1135 = vpop.f32.mrb[0].mxu0
  %v1136 = vadd.f32 %v1024, %v1135
  %v1137 = vpop.f32.mrb[0].mxu0
  %1138 = vmatprep.mubr.bf16.mxu0 %v526
  %1139 = vmatmul.mubr.bf16.gmra.mrb[0].mxu0 %v525
  %v1140 = vpop.f32.mrb[0].mxu0
  %v1141 = vadd.f32 %v1024, %v1140
  %v1142 = vpop.f32.mrb[0].mxu0
  %v1143 = vpop.f32.mrb[0].mxu0
  %v1144 = vadd.f32 %v1024, %v1143
  %v1145 = vpop.f32.mrb[0].mxu0
  %1146 = vmatprep.mubr.bf16.mxu0 %v528
  %1147 = vmatmul.mubr.bf16.gmra.mrb[0].mxu0 %v527
  %v1148 = vpop.f32.mrb[0].mxu0
  %v1149 = vadd.f32 %v1024, %v1148
  %v1150 = vpop.f32.mrb[0].mxu0
  %v1151 = vpop.f32.mrb[0].mxu0
  %v1152 = vadd.f32 %v1024, %v1151
  %v1153 = vpop.f32.mrb[0].mxu0
  %1154 = vmatprep.mubr.bf16.mxu0 %v530
  %1155 = vmatmul.mubr.bf16.gmra.mrb[0].mxu0 %v529
  %v1156 = vpop.f32.mrb[0].mxu0
  %v1157 = vadd.f32 %v1024, %v1156
  %v1158 = vpop.f32.mrb[0].mxu0
  %v1159 = vpop.f32.mrb[0].mxu0
  %v1160 = vadd.f32 %v1024, %v1159
  %v1161 = vpop.f32.mrb[0].mxu0
  %1162 = vmatprep.mubr.bf16.mxu0 %v532
  %1163 = vmatmul.mubr.bf16.gmra.mrb[0].mxu0 %v531
  %v1164 = vpop.f32.mrb[0].mxu0
  %v1165 = vadd.f32 %v1024, %v1164
  %v1166 = vpop.f32.mrb[0].mxu0
  %v1167 = vpop.f32.mrb[0].mxu0
  %v1168 = vadd.f32 %v1024, %v1167
  %v1169 = vpop.f32.mrb[0].mxu0
  %1170 = vmatprep.mubr.bf16.mxu0 %v534
  %1171 = vmatmul.mubr.bf16.gmra.mrb[0].mxu0 %v533
  %v1172 = vpop.f32.mrb[0].mxu0
  %v1173 = vadd.f32 %v1024, %v1172
  %v1174 = vpop.f32.mrb[0].mxu0
  %v1175 = vpop.f32.mrb[0].mxu0
  %v1176 = vadd.f32 %v1024, %v1175
  %v1177 = vpop.f32.mrb[0].mxu0
  %1178 = vmatprep.mubr.bf16.mxu0 %v536
  %1179 = vmatmul.mubr.bf16.gmra.mrb[0].mxu0 %v535
  %v1180 = vpop.f32.mrb[0].mxu0
  %v1181 = vadd.f32 %v1024, %v1180
  %v1182 = vpop.f32.mrb[0].mxu0
  %v1183 = vpop.f32.mrb[0].mxu0
  %v1184 = vadd.f32 %v1024, %v1183
  %v1185 = vpop.f32.mrb[0].mxu0
  %1186 = vdwg.mxu0
  %1187 = vst [vmem:[%s6] sm:$0xff] %v1061
  %1188 = vst [vmem:[%s6 + $0x8] sm:$0xff] %v1064
  %1189 = vst [vmem:[%s6 + $0x10] sm:$0xff] %v1069
  %1190 = vst [vmem:[%s6 + $0x18] sm:$0xff] %v1072
  %1191 = vst [vmem:[%s6 + $0x20] sm:$0xff] %v1077
  %1192 = vst [vmem:[%s6 + $0x28] sm:$0xff] %v1080
  %1193 = vst [vmem:[%s6 + $0x30] sm:$0xff] %v1085
  %1194 = vst [vmem:[%s6 + $0x38] sm:$0xff] %v1088
  %1195 = vst [vmem:[%s6 + $0x40] sm:$0xff] %v1093
  %1196 = vst [vmem:[%s6 + $0x48] sm:$0xff] %v1096
  %1197 = vst [vmem:[%s6 + $0x50] sm:$0xff] %v1101
  %1198 = vst [vmem:[%s6 + $0x58] sm:$0xff] %v1104
  %1199 = vst [vmem:[%s6 + $0x60] sm:$0xff] %v1109
  %1200 = vst [vmem:[%s6 + $0x68] sm:$0xff] %v1112
  %1201 = vst [vmem:[%s6 + $0x70] sm:$0xff] %v1117
  %1202 = vst [vmem:[%s6 + $0x78] sm:$0xff] %v1120
  %1203 = vst [vmem:[%s6 + $0x80] sm:$0xff] %v1125
  %1204 = vst [vmem:[%s6 + $0x88] sm:$0xff] %v1128
  %1205 = vst [vmem:[%s6 + $0x90] sm:$0xff] %v1133
  %1206 = vst [vmem:[%s6 + $0x98] sm:$0xff] %v1136
  %1207 = vst [vmem:[%s6 + $0xa0] sm:$0xff] %v1141
  %1208 = vst [vmem:[%s6 + $0xa8] sm:$0xff] %v1144
  %1209 = vst [vmem:[%s6 + $0xb0] sm:$0xff] %v1149
  %1210 = vst [vmem:[%s6 + $0xb8] sm:$0xff] %v1152
  %1211 = vst [vmem:[%s6 + $0xc0] sm:$0xff] %v1157
  %1212 = vst [vmem:[%s6 + $0xc8] sm:$0xff] %v1160
  %1213 = vst [vmem:[%s6 + $0xd0] sm:$0xff] %v1165
  %1214 = vst [vmem:[%s6 + $0xd8] sm:$0xff] %v1168
  %1215 = vst [vmem:[%s6 + $0xe0] sm:$0xff] %v1173
  %1216 = vst [vmem:[%s6 + $0xe8] sm:$0xff] %v1176
  %1217 = vst [vmem:[%s6 + $0xf0] sm:$0xff] %v1181
  %1218 = vst [vmem:[%s6 + $0xf8] sm:$0xff] %v1184
  // Predicated region
  $region26: #{gcn_encoder.1} parent=0 // pred_check
    _
  $region27: #{gcn_encoder.1} parent=0 // pred_check_branch
    %1220 = sbr.rel (0) target = $region29
  $region28: #{gcn_encoder.1} parent=0 // pred_region
    _
  $region29: #{gcn_encoder.1} parent=0 // pred_fallthru
    _
  // Predicated region
  $region30: #{gcn_encoder.1} parent=0 // pred_check
    _
  $region31: #{gcn_encoder.1} parent=0 // pred_check_branch
    %1222 = sbr.rel (0) target = $region33
  $region32: #{gcn_encoder.1} parent=0 // pred_region
    _
  $region33: #{gcn_encoder.1} parent=0 // pred_fallthru
    _

</llo_original>
